<compile_context>
chip_gen: v5e
topology: v5e:2x2
jax: 0.10.0
libtpu: 0.0.40
codegen_flags: <defaults>
</compile_context>

<pallas_src>
import jax
import jax.numpy as jnp
from jax.experimental import pallas as pl
from jax.experimental.pallas import tpu as pltpu

# --- model hyper-parameters (small, consistent with the module) -------------
B = 2          # instances per bag (MIL "batch" N)
C = 4          # channels -> attention in_features M
H = 16
W = 16
M = C          # attention_params['in_features']
L = 16         # attention_params['decom_space']
K = 4          # attention_params['ATTENTION_BRANCHES']
HID = 64       # fc_params['hidden_units']
OUT = 2        # fc_params['out_features']

# --- compact weight-slab layout (32 rows x 256 lanes = 32 KB f32) -----------
SLAB_C = K * HID            # 256 lanes
SLAB_R = 32
R_VUW = 0                   # rows 0..3   (M, 2L)    fused [V^T | U^T]
R_VUB = 4                   # row  4      (1, 2L)    fused [Vb | Ub]
R_WB = 5                    # row  5      (1, K)     attention_w bias
R_B1 = 6                    # row  6      (1, HID)   fc1 bias
R_B2 = 7                    # row  7      (1, OUT)   fc2 bias
R_WW = 8                    # rows 8..23  (L, K)     attention_w weight, transposed
R_W1 = 24                   # rows 24..27 (M, K*HID) fc1 weight, rearranged
R_W2 = 28                   # rows 28..29 (OUT, HID) fc2 weight (contracted trans-B)

OUT_COLS = 128              # one lane-dense output row per bag
MAX_BAG_BLOCK = 128         # sized for v7x's 64 MiB VMEM (tiny on v5e/v6e too)


def attention_model_kernel(x_ref, w_ref, out_ref):
    # x_ref:   (bag_block, B, C, H*W)   instances of a block of bags
    # w_ref:   (SLAB_R, SLAB_C)         packed weights (resident across grid)
    # out_ref: (bag_block, 128)         per-bag [logits | attn(B,K) | 0...]

    # ---- adaptive_avg_pool2d(x, (1,1)) + flatten -> (G, B, M) ---------------
    flat = jnp.mean(x_ref[...], axis=-1)                           # (G, B, M)

    # ---- GatedAttention: fused [V|U] projection ------------------------------
    vu_w = w_ref[R_VUW:R_VUW + M, 0:2 * L]                         # (M, 2L)
    vu = jnp.einsum('gbm,mn->gbn', flat, vu_w,
                    preferred_element_type=jnp.float32)            # (G, B, 2L)
    vu = vu + w_ref[R_VUB:R_VUB + 1, 0:2 * L]
    gated = jnp.tanh(vu[..., 0:L]) * jax.nn.sigmoid(vu[..., L:2 * L])  # (G, B, L)

    # attention logits (G, B, K) = gated @ ww^T + b (ww pre-transposed)
    ww = w_ref[R_WW:R_WW + L, 0:K]                                 # (L, K)
    a = jnp.einsum('gbl,lk->gbk', gated, ww,
                   preferred_element_type=jnp.float32)             # (G, B, K)
    a = a + w_ref[R_WB:R_WB + 1, 0:K]

    # softmax over instances (axis=1 == N within each bag)
    a = a - jnp.max(a, axis=1, keepdims=True)
    e = jnp.exp(a)
    attn = e * pl.reciprocal(jnp.sum(e, axis=1, keepdims=True),
                             approx=True)                          # (G, B, K)

    # Z = A^T @ flat per bag -> (G, K, M)
    z = jnp.einsum('gbk,gbm->gkm', attn, flat,
                   preferred_element_type=jnp.float32)             # (G, K, M)

    # ---- FC head: Linear(K*M -> HID) as ONE matmul ---------------------------
    # w1 rearranged in pack_weights() to (M, K*HID); the k-th diagonal HID-wide
    # block of row k of `g` is z[k,:] @ W1_k, folded with static lane slices.
    w1m = w_ref[R_W1:R_W1 + M, 0:K * HID]                          # (M, K*HID)
    g = jnp.einsum('gkm,mn->gkn', z, w1m,
                   preferred_element_type=jnp.float32)             # (G, K, K*HID)
    h = w_ref[R_B1:R_B1 + 1, 0:HID]                                # (1, HID)
    for k in range(K):                                             # static unroll (VPU adds)
        h = h + g[:, k, k * HID:(k + 1) * HID]                     # (G, HID)
    h = jnp.maximum(h, 0.0)
    # Dropout(p=0.5) is identity at inference time.
    w2 = w_ref[R_W2:R_W2 + OUT, 0:HID]                             # (OUT, HID)
    logits = jnp.einsum('gh,oh->go', h, w2,
                        preferred_element_type=jnp.float32)        # (G, OUT)
    logits = logits + w_ref[R_B2:R_B2 + 1, 0:OUT]

    # ---- single full-width (unmasked) store per bag row ----------------------
    nb = logits.shape[0]
    pieces = [logits] + [attn[:, i, :] for i in range(B)]
    pad = jnp.zeros((nb, OUT_COLS - OUT - B * K), jnp.float32)
    out_ref[...] = jnp.concatenate(pieces + [pad], axis=1)         # (G, 128)


def pack_weights(params):
    """Pack all weights/biases (pre-transposed / rearranged) into one slab.

    Call ONCE at parameter-init time; pass the resulting (32, 256) slab to the
    jitted forward so the packing graph is not re-run per call.
    """
    vw, vb, uw, ub, ww, wb, w1, b1, w2, b2 = params
    slab = jnp.zeros((SLAB_R, SLAB_C), jnp.float32)
    slab = slab.at[R_VUW:R_VUW + M, 0:2 * L].set(
        jnp.concatenate([vw.T, uw.T], axis=1))                     # (M, 2L)
    slab = slab.at[R_VUB, 0:2 * L].set(jnp.concatenate([vb, ub]))  # (2L,)
    slab = slab.at[R_WB, 0:K].set(wb)
    slab = slab.at[R_B1, 0:HID].set(b1)
    slab = slab.at[R_B2, 0:OUT].set(b2)
    slab = slab.at[R_WW:R_WW + L, 0:K].set(ww.T)                   # (L, K)
    # W1[j, k*M + m] -> w1m[m, k*HID + j]
    w1m = w1.reshape(HID, K, M).transpose(2, 1, 0).reshape(M, K * HID)
    slab = slab.at[R_W1:R_W1 + M, 0:K * HID].set(w1m)
    slab = slab.at[R_W2:R_W2 + OUT, 0:HID].set(w2)                 # (OUT, HID)
    return slab


def _pick_bag_block(num_bags):
    # Largest multiple-of-8 divisor of num_bags, capped at MAX_BAG_BLOCK (sized
    # for v7x's 64 MiB VMEM); otherwise one grid step over all bags.
    for bb in (128, 64, 32, 16, 8):
        if bb <= MAX_BAG_BLOCK and num_bags % bb == 0:
            return bb
    return num_bags


def attention_model_forward_bags(x_bags, wslab):
    """Batched-bag forward. x_bags: (G, B, C, H, W) f32.

    Returns (logits (G, OUT), attn (G, K, B)). One pallas_call with a grid
    over bag blocks; the weight slab stays resident in VMEM across steps.
    """
    num_bags, b, c, h, w = x_bags.shape
    assert b == B and c == C
    x3 = x_bags.reshape(num_bags, b, c, h * w).astype(jnp.float32)
    bag_block = _pick_bag_block(num_bags)
    grid = (num_bags // bag_block,)

    out = pl.pallas_call(
        attention_model_kernel,
        out_shape=jax.ShapeDtypeStruct((num_bags, OUT_COLS), jnp.float32),
        grid=grid,
        in_specs=[
            pl.BlockSpec((bag_block, b, c, h * w), lambda g: (g, 0, 0, 0)),
            pl.BlockSpec((SLAB_R, SLAB_C), lambda g: (0, 0)),   # resident weights
        ],
        out_specs=pl.BlockSpec((bag_block, OUT_COLS), lambda g: (g, 0)),
        compiler_params=pltpu.CompilerParams(
            dimension_semantics=("parallel",)),                 # 2x on v7x (2 TCs)
    )(x3, wslab)

    logits = out[:, 0:OUT]                                      # (G, OUT)
    attn = out[:, OUT:OUT + b * K].reshape(num_bags, b, K)      # (G, B, K)
    attn = jnp.transpose(attn, (0, 2, 1))                       # (G, K, B)
    return logits, attn


def attention_model_forward(x, wslab):
    """Single bag, matching AttentionModel.forward. x: (B, C, H, W) f32.

    Returns (logits (1, OUT), attention_weights (K, B))."""
    logits, attn = attention_model_forward_bags(x[None], wslab)
    return logits, attn[0]


def make_params(key):
    ks = jax.random.split(key, 10)
    s = 0.1
    vw = s * jax.random.normal(ks[0], (L, M), jnp.float32)
    vb = s * jax.random.normal(ks[1], (L,), jnp.float32)
    uw = s * jax.random.normal(ks[2], (L, M), jnp.float32)
    ub = s * jax.random.normal(ks[3], (L,), jnp.float32)
    ww = s * jax.random.normal(ks[4], (K, L), jnp.float32)
    wb = s * jax.random.normal(ks[5], (K,), jnp.float32)
    w1 = s * jax.random.normal(ks[6], (HID, K * M), jnp.float32)
    b1 = s * jax.random.normal(ks[7], (HID,), jnp.float32)
    w2 = s * jax.random.normal(ks[8], (OUT, HID), jnp.float32)
    b2 = s * jax.random.normal(ks[9], (OUT,), jnp.float32)
    return (vw, vb, uw, ub, ww, wb, w1, b1, w2, b2)


def reference_forward(x, params):
    """Pure-JAX reference (mirrors the PyTorch module in eval mode)."""
    vw, vb, uw, ub, ww, wb, w1, b1, w2, b2 = params
    pooled = jnp.mean(x.reshape(x.shape[0], x.shape[1], -1), axis=-1)   # (N, M)
    av = jnp.tanh(pooled @ vw.T + vb)
    au = jax.nn.sigmoid(pooled @ uw.T + ub)
    a = (av * au) @ ww.T + wb                                           # (N, K)
    a = a.T                                                             # (K, N)
    a = jax.nn.softmax(a, axis=1)
    z = a @ pooled                                                      # (K, M)
    zf = z.reshape(1, K * M)
    hh = jnp.maximum(zf @ w1.T + b1, 0.0)                               # dropout = id (eval)
    o = hh @ w2.T + b2
    return o, a


if __name__ == "__main__":
    key = jax.random.PRNGKey(0)
    kx, kxs, kp = jax.random.split(key, 3)
    params = make_params(kp)
    wslab = pack_weights(params)          # packed ONCE, outside the jitted forward

    # --- single bag, exactly the PyTorch module's shapes: (2, 4, 16, 16) ----
    x = jax.random.normal(kx, (B, C, H, W), jnp.float32)
    fwd = jax.jit(attention_model_forward)
    out, attn = fwd(x, wslab)
    jax.block_until_ready((out, attn))

    ref_out, ref_attn = reference_forward(x, params)
    assert out.shape == (1, OUT) and attn.shape == (K, B)
    assert jnp.allclose(out, ref_out, atol=1e-3, rtol=1e-3)
    assert jnp.allclose(attn, ref_attn, atol=1e-3, rtol=1e-3)

    # --- batched bags: one grid-parallel call, weight slab resident ----------
    G = 8
    xs = jax.random.normal(kxs, (G, B, C, H, W), jnp.float32)
    fwd_bags = jax.jit(attention_model_forward_bags)
    logits_g, attn_g = fwd_bags(xs, wslab)
    jax.block_until_ready((logits_g, attn_g))
    for g in range(G):
        ro, ra = reference_forward(xs[g], params)
        assert jnp.allclose(logits_g[g:g + 1], ro, atol=1e-3, rtol=1e-3)
        assert jnp.allclose(attn_g[g], ra, atol=1e-3, rtol=1e-3)

    print("KERNEL_OK")
</pallas_src>

<mosaic_0001>
module attributes {stable_mosaic.version = 11 : i64} {
  func.func @attention_model_kernel(%arg0: i32, %arg1: memref<1x2x4x256xf32, #tpu.memory_space<vmem>>, %arg2: memref<32x256xf32, #tpu.memory_space<vmem>>, %arg3: memref<1x128xf32, #tpu.memory_space<vmem>>) attributes {dimension_semantics = [#tpu.dimension_semantics<parallel>], iteration_bounds = array<i64: 1>, scalar_prefetch = 0 : i64, scratch_operands = 0 : i64, tpu.core_type = #tpu.core_type<tc>, window_params = [{transform_indices = @transform_0, window_bounds = array<i64: 1, 2, 4, 256>}, {pipeline_mode = #tpu.pipeline_mode<synchronous>, transform_indices = @transform_1, window_bounds = array<i64: 32, 256>}, {transform_indices = @transform_2, window_bounds = array<i64: 1, 128>}]} {
    %c0 = arith.constant 0 : index
    %c0_0 = arith.constant 0 : index
    %c0_1 = arith.constant 0 : index
    %c0_2 = arith.constant 0 : index
    %0 = vector.load %arg1[%c0, %c0_0, %c0_1, %c0_2] : memref<1x2x4x256xf32, #tpu.memory_space<vmem>>, vector<1x2x4x256xf32>
    %cst = arith.constant dense<0.000000e+00> : vector<1x2x4xf32>
    %1 = vector.multi_reduction <add>, %0, %cst [3] : vector<1x2x4x256xf32> to vector<1x2x4xf32>
    %cst_3 = arith.constant 2.560000e+02 : f32
    %2 = vector.broadcast %cst_3 : f32 to vector<1x2x4xf32>
    %3 = arith.divf %1, %2 : vector<1x2x4xf32>
    %c0_4 = arith.constant 0 : index
    %c0_5 = arith.constant 0 : index
    %4 = vector.load %arg2[%c0_4, %c0_5] : memref<32x256xf32, #tpu.memory_space<vmem>>, vector<4x32xf32>
    "tpu.trace_start"() <{level = 10 : i32, message = "gbm,mn->gbn"}> : () -> ()
    %cst_6 = arith.constant dense<0.000000e+00> : vector<1x2x32xf32>
    %5 = tpu.matmul %3, %4, %cst_6 {dimension_numbers = #tpu.dot_dimension_numbers<[2], [0], [0, 1], [1], [0, 0, 0, 1, 1, 1], [], []>} : vector<1x2x4xf32>, vector<4x32xf32>, vector<1x2x32xf32> -> vector<1x2x32xf32>
    "tpu.trace_stop"() : () -> ()
    %c4 = arith.constant 4 : index
    %c0_7 = arith.constant 0 : index
    %6 = vector.load %arg2[%c4, %c0_7] : memref<32x256xf32, #tpu.memory_space<vmem>>, vector<1x32xf32>
    %7 = vector.shape_cast %6 : vector<1x32xf32> to vector<1x1x32xf32>
    %8 = vector.broadcast %7 : vector<1x1x32xf32> to vector<1x2x32xf32>
    %9 = arith.addf %5, %8 : vector<1x2x32xf32>
    %10 = vector.extract_strided_slice %9 {offsets = [0, 0, 0], sizes = [1, 2, 16], strides = [1, 1, 1]} : vector<1x2x32xf32> to vector<1x2x16xf32>
    %11 = math.tanh %10 : vector<1x2x16xf32>
    %12 = vector.extract_strided_slice %9 {offsets = [0, 0, 16], sizes = [1, 2, 16], strides = [1, 1, 1]} : vector<1x2x32xf32> to vector<1x2x16xf32>
    %13 = arith.negf %12 : vector<1x2x16xf32>
    %14 = math.exp %13 : vector<1x2x16xf32>
    %cst_8 = arith.constant 1.000000e+00 : f32
    %15 = vector.broadcast %cst_8 : f32 to vector<1x2x16xf32>
    %16 = arith.addf %15, %14 : vector<1x2x16xf32>
    %17 = arith.divf %15, %16 : vector<1x2x16xf32>
    %18 = arith.mulf %11, %17 : vector<1x2x16xf32>
    %c8 = arith.constant 8 : index
    %c0_9 = arith.constant 0 : index
    %19 = vector.load %arg2[%c8, %c0_9] : memref<32x256xf32, #tpu.memory_space<vmem>>, vector<16x4xf32>
    "tpu.trace_start"() <{level = 10 : i32, message = "gbl,lk->gbk"}> : () -> ()
    %cst_10 = arith.constant dense<0.000000e+00> : vector<1x2x4xf32>
    %20 = tpu.matmul %18, %19, %cst_10 {dimension_numbers = #tpu.dot_dimension_numbers<[2], [0], [0, 1], [1], [0, 0, 0, 1, 1, 1], [], []>} : vector<1x2x16xf32>, vector<16x4xf32>, vector<1x2x4xf32> -> vector<1x2x4xf32>
    "tpu.trace_stop"() : () -> ()
    %c5 = arith.constant 5 : index
    %c0_11 = arith.constant 0 : index
    %21 = vector.load %arg2[%c5, %c0_11] : memref<32x256xf32, #tpu.memory_space<vmem>>, vector<1x4xf32>
    %22 = vector.shape_cast %21 : vector<1x4xf32> to vector<1x1x4xf32>
    %23 = vector.broadcast %22 : vector<1x1x4xf32> to vector<1x2x4xf32>
    %24 = arith.addf %20, %23 : vector<1x2x4xf32>
    %cst_12 = arith.constant dense<0xFF800000> : vector<1x4xf32>
    %25 = vector.multi_reduction <maximumf>, %24, %cst_12 [1] : vector<1x2x4xf32> to vector<1x4xf32>
    %26 = vector.shape_cast %25 : vector<1x4xf32> to vector<1x1x4xf32>
    %27 = vector.broadcast %26 : vector<1x1x4xf32> to vector<1x2x4xf32>
    %28 = arith.subf %24, %27 : vector<1x2x4xf32>
    %29 = math.exp %28 : vector<1x2x4xf32>
    %cst_13 = arith.constant dense<0.000000e+00> : vector<1x4xf32>
    %30 = vector.multi_reduction <add>, %29, %cst_13 [1] : vector<1x2x4xf32> to vector<1x4xf32>
    %31 = vector.shape_cast %30 : vector<1x4xf32> to vector<1x1x4xf32>
    %32 = tpu.reciprocal %31 {approx = true} : vector<1x1x4xf32> -> vector<1x1x4xf32>
    %33 = vector.broadcast %32 : vector<1x1x4xf32> to vector<1x2x4xf32>
    %34 = arith.mulf %29, %33 : vector<1x2x4xf32>
    "tpu.trace_start"() <{level = 10 : i32, message = "gbk,gbm->gkm"}> : () -> ()
    %cst_14 = arith.constant dense<0.000000e+00> : vector<1x4x4xf32>
    %35 = tpu.matmul %34, %3, %cst_14 {dimension_numbers = #tpu.dot_dimension_numbers<[1], [1], [2], [2], [0, 0, 0, 2, 1, 2], [0], [0]>} : vector<1x2x4xf32>, vector<1x2x4xf32>, vector<1x4x4xf32> -> vector<1x4x4xf32>
    "tpu.trace_stop"() : () -> ()
    %c24 = arith.constant 24 : index
    %c0_15 = arith.constant 0 : index
    %36 = vector.load %arg2[%c24, %c0_15] : memref<32x256xf32, #tpu.memory_space<vmem>>, vector<4x256xf32>
    "tpu.trace_start"() <{level = 10 : i32, message = "gkm,mn->gkn"}> : () -> ()
    %cst_16 = arith.constant dense<0.000000e+00> : vector<1x4x256xf32>
    %37 = tpu.matmul %35, %36, %cst_16 {dimension_numbers = #tpu.dot_dimension_numbers<[2], [0], [0, 1], [1], [0, 0, 0, 1, 1, 1], [], []>} : vector<1x4x4xf32>, vector<4x256xf32>, vector<1x4x256xf32> -> vector<1x4x256xf32>
    "tpu.trace_stop"() : () -> ()
    %c6 = arith.constant 6 : index
    %c0_17 = arith.constant 0 : index
    %38 = vector.load %arg2[%c6, %c0_17] : memref<32x256xf32, #tpu.memory_space<vmem>>, vector<1x64xf32>
    %39 = vector.extract_strided_slice %37 {offsets = [0, 0, 0], sizes = [1, 1, 64], strides = [1, 1, 1]} : vector<1x4x256xf32> to vector<1x1x64xf32>
    %40 = vector.shape_cast %39 : vector<1x1x64xf32> to vector<1x64xf32>
    %41 = arith.addf %38, %40 : vector<1x64xf32>
    %42 = vector.extract_strided_slice %37 {offsets = [0, 1, 64], sizes = [1, 1, 64], strides = [1, 1, 1]} : vector<1x4x256xf32> to vector<1x1x64xf32>
    %43 = vector.shape_cast %42 : vector<1x1x64xf32> to vector<1x64xf32>
    %44 = arith.addf %41, %43 : vector<1x64xf32>
    %45 = vector.extract_strided_slice %37 {offsets = [0, 2, 128], sizes = [1, 1, 64], strides = [1, 1, 1]} : vector<1x4x256xf32> to vector<1x1x64xf32>
    %46 = vector.shape_cast %45 : vector<1x1x64xf32> to vector<1x64xf32>
    %47 = arith.addf %44, %46 : vector<1x64xf32>
    %48 = vector.extract_strided_slice %37 {offsets = [0, 3, 192], sizes = [1, 1, 64], strides = [1, 1, 1]} : vector<1x4x256xf32> to vector<1x1x64xf32>
    %49 = vector.shape_cast %48 : vector<1x1x64xf32> to vector<1x64xf32>
    %50 = arith.addf %47, %49 : vector<1x64xf32>
    %cst_18 = arith.constant 0.000000e+00 : f32
    %51 = vector.broadcast %cst_18 : f32 to vector<1x64xf32>
    %52 = arith.maximumf %50, %51 : vector<1x64xf32>
    %c28 = arith.constant 28 : index
    %c0_19 = arith.constant 0 : index
    %53 = vector.load %arg2[%c28, %c0_19] : memref<32x256xf32, #tpu.memory_space<vmem>>, vector<2x64xf32>
    "tpu.trace_start"() <{level = 10 : i32, message = "gh,oh->go"}> : () -> ()
    %cst_20 = arith.constant dense<0.000000e+00> : vector<1x2xf32>
    %54 = tpu.matmul %52, %53, %cst_20 {dimension_numbers = #tpu.dot_dimension_numbers<[1], [1], [0], [0], [0, 0, 1, 0], [], []>} : vector<1x64xf32>, vector<2x64xf32>, vector<1x2xf32> -> vector<1x2xf32>
    "tpu.trace_stop"() : () -> ()
    %c7 = arith.constant 7 : index
    %c0_21 = arith.constant 0 : index
    %55 = vector.load %arg2[%c7, %c0_21] : memref<32x256xf32, #tpu.memory_space<vmem>>, vector<1x2xf32>
    %56 = arith.addf %54, %55 : vector<1x2xf32>
    %57 = vector.extract_strided_slice %34 {offsets = [0, 0, 0], sizes = [1, 1, 4], strides = [1, 1, 1]} : vector<1x2x4xf32> to vector<1x1x4xf32>
    %58 = vector.shape_cast %57 : vector<1x1x4xf32> to vector<1x4xf32>
    %59 = vector.extract_strided_slice %34 {offsets = [0, 1, 0], sizes = [1, 1, 4], strides = [1, 1, 1]} : vector<1x2x4xf32> to vector<1x1x4xf32>
    %60 = vector.shape_cast %59 : vector<1x1x4xf32> to vector<1x4xf32>
    %cst_22 = arith.constant 0.000000e+00 : f32
    %61 = vector.broadcast %cst_22 : f32 to vector<1x118xf32>
    %62 = tpu.concatenate %56, %58, %60, %61 in 1 : vector<1x2xf32>, vector<1x4xf32>, vector<1x4xf32>, vector<1x118xf32> -> vector<1x128xf32>
    %c0_23 = arith.constant 0 : index
    %c0_24 = arith.constant 0 : index
    %63 = vector.load %arg3[%c0_23, %c0_24] : memref<1x128xf32, #tpu.memory_space<vmem>>, vector<1x128xf32>
    tpu.vector_store %arg3[%c0_23, %c0_24], %62 {strides = array<i32>} : memref<1x128xf32, #tpu.memory_space<vmem>>, vector<1x128xf32>,
    return
  }
  func.func @transform_0(%arg0: i32) -> (i32, i32, i32, i32) {
    %c0_i32 = arith.constant 0 : i32
    %c0_i32_0 = arith.constant 0 : i32
    %c0_i32_1 = arith.constant 0 : i32
    %c0_i32_2 = arith.constant 0 : i32
    return %arg0, %c0_i32, %c0_i32_0, %c0_i32_1 : i32, i32, i32, i32
  }
  func.func @transform_1(%arg0: i32) -> (i32, i32) {
    %c0_i32 = arith.constant 0 : i32
    %c0_i32_0 = arith.constant 0 : i32
    %c0_i32_1 = arith.constant 0 : i32
    return %c0_i32, %c0_i32_0 : i32, i32
  }
  func.func @transform_2(%arg0: i32) -> (i32, i32) {
    %c0_i32 = arith.constant 0 : i32
    %c0_i32_0 = arith.constant 0 : i32
    return %arg0, %c0_i32 : i32, i32
  }
}

</mosaic_0001>

<llo_original>
// kernel: attention_model_forward.1
$region0: #{attention_model_forward.1}
  #allocation0 [shape = 'u32[]', space=smem, size = 0x4, offset = 0x4, fixed_abs, tag = 'smem constant byte address 0x4 - core index']
  #allocation1 [shape = 'u32[72,128]{1,0:T(1,128)}', space=vmem, size = 0x9000, scoped, tag = 'internal scratch']
  %s0 = inlined_call_operand.vmem [shape: f32[1,2,4,256], index: 0, kind: input, shape index: {}]
  %s1 = inlined_call_operand.vmem [shape: f32[32,256], index: 1, kind: input, shape index: {}]
  %s2 = inlined_call_operand.vmem [shape: f32[1,128], index: 2, kind: output, shape index: {}]
  %s3 = sld [smem:[#allocation0]]
  $region18: #{attention_model_forward.1} parent=0
    _
  %s5 = ssub.s32 1, %s3
  %s6 = scalar_select 0, %s5, %s3
  // Predicated region
  $region2: #{attention_model_forward.1} parent=0 // pred_check
    _
  $region3: #{attention_model_forward.1} parent=0 // pred_check_branch
    %8 = sbr.rel (0) target = $region5
  $region4: #{attention_model_forward.1} parent=0 // pred_region
    _
  $region5: #{attention_model_forward.1} parent=0 // pred_fallthru
    _
  // Predicated region
  $region6: #{attention_model_forward.1} parent=0 // pred_check
    _
  $region7: #{attention_model_forward.1} parent=0 // pred_check_branch
    %10 = sbr.rel (0) target = $region9
  $region8: #{attention_model_forward.1} parent=0 // pred_region
    _
  $region9: #{attention_model_forward.1} parent=0 // pred_fallthru
    _
  %v11 = vld [vmem:[%s0] sm:$0xff]
  %v12 = vld [vmem:[%s0 + $0x8] sm:$0xff]
  %15 = vst [vmem:[#allocation1] ss:$2 sm:$0xff] %v11
  %v16 = vld.sshfl [vmem:[#allocation1] sm:$0xff pattern:$0x75316420]
  %v17 = vld.sshfl [vmem:[#allocation1 + $0x8] sm:$0xff pattern:$0x75316420]
  %s18 = scalar_lea.vmem [#allocation1], 16
  %19 = vst [vmem:[%s18] ss:$2 sm:$0xff] %v12
  %v20 = vld.sshfl [vmem:[#allocation1 + $0x10] sm:$0xff pattern:$0x75316420]
  %v21 = vld.sshfl [vmem:[#allocation1 + $0x18] sm:$0xff pattern:$0x75316420]
  %vm26 = vcmask 1043456
  %v27 = vsel %vm26, %v16, 0.0
  %v28 = vsel %vm26, %v17, 0.0
  %v29 = vadd.f32 %v27, %v28
  %30 = vadd.xlane.f32.xlu0 %v29
  %v31 = vpop.xlane.xlu0 %30
  %v32 = vsel %vm26, %v20, 0.0
  %v33 = vsel %vm26, %v21, 0.0
  %v34 = vadd.f32 %v32, %v33
  %35 = vadd.xlane.f32.xlu0 %v34
  %v36 = vpop.xlane.xlu0 %35
  %v37 = vrcp.pop 256.0
  %v38 = vmul.f32 256.0, %v37
  %v39 = vsub.f32 1.0, %v38
  %v40 = vmul.f32 %v37, %v39
  %v41 = vadd.f32 %v37, %v40
  %vm42 = vweird.f32 %v37
  %v43 = vsel %vm42, %v37, %v41
  %v44 = vmul.f32 %v31, %v43
  %v45 = vmul.f32 %v36, %v43
  %v46 = vld [vmem:[%s1] sm:$0xf]
  %v47 = vld [vmem:[%s1 + $0x4] ss:$0 sm:$0xff]
  %v50 = vlaneseq
  %v51 = vand.u32 %v50, 127
  %v52 = vperm.slane %v44, %v51
  %v53 = vperm.slane %v45, %v51
  %vm54 = vcmask 1041409
  %v55 = vsel %vm54, %v53, %v52
  %vm56 = vcmask 31744
  %v57 = vsel %vm56, %v55, 0
  %v60 = vsel %vm26, %v46, 0
  %62 = vmatpush.msra.mxu0 0.0
  %63 = vmatpush.msra.mxu0 0.0
  %64 = vmatpush.msra.mxu0 0.0
  %65 = vmatpush.msra.mxu0 0.0
  %66 = vmatpush.msra.mxu0 0.0
  %67 = vmatpush.msra.mxu0 0.0
  %68 = vmatpush.msra.mxu0 0.0
  %69 = vmatpush.msra.mxu0 0.0
  %70 = vmatpush.msra.mxu0 0.0
  %71 = vmatpush.msra.mxu0 0.0
  %72 = vmatpush.msra.mxu0 0.0
  %73 = vmatpush.msra.mxu0 0.0
  %74 = vmatpush.msra.mxu0 0.0
  %75 = vmatpush.msra.mxu0 0.0
  %76 = vmatpush.msra.mxu0 0.0
  %77 = vmatpush.msra.mxu0 %v60
  %78 = vmatmul.f32.gmra.mxu0 %v57
  %v79 = vpop.f32.mrf.mxu0
  %v80 = vadd.f32 %v47, %v79
  %81 = vdwg.mxu0
  %v82 = vtanh.pop %v80
  %v83 = vxor.u32 %v80, 2147483648
  %v84 = vmul.f32 %v83, 1.442695
  %v85 = vpow.pop %v84
  %v86 = vadd.f32 %v85, 1.0
  %v87 = vrcp.pop %v86
  %v88 = vmul.f32 %v86, %v87
  %v89 = vsub.f32 1.0, %v88
  %v90 = vmul.f32 %v87, %v89
  %v91 = vadd.f32 %v87, %v90
  %vm92 = vweird.f32 %v86
  %vm93 = vweird.f32 %v87
  %vm94 = vmor %vm92, %vm93
  %v95 = vsel %vm94, %v87, %v91
  %v96 = vand.u32 2147483647, %v86
  %vm97 = vcmp.eq.f32.partialorder %v96, 8.507059e+37
  %v98 = vand.u32 %v86, 2147483648
  %v99 = vor.u32 1.1754944e-38, %v98
  %v100 = vsel %vm97, %v99, %v95
  %v101 = vmul.f32 1.0, %v100
  %103 = vrot.lane.b32.xlu0 %v101, 112
  %v104 = vpop.permute.xlu0 %103
  %v106 = vmul.f32 %v82, %v104
  %v107 = vld [vmem:[%s1 + $0x10] sm:$0xff]
  %v108 = vld [vmem:[%s1 + $0x20] sm:$0xff]
  %v109 = vld [vmem:[%s1 + $0x5] ss:$0 sm:$0xff]
  %vm110 = vcmask 130048
  %v112 = vsel %vm110, %v106, 0
  %114 = vmatpush.msra.mxu0 0.0
  %115 = vmatpush.msra.mxu0 0.0
  %116 = vmatpush.msra.mxu0 0.0
  %117 = vmatpush.msra.mxu0 0.0
  %118 = vmatpush.msra.mxu0 0.0
  %119 = vmatpush.msra.mxu0 0.0
  %120 = vmatpush.msra.mxu0 0.0
  %121 = vmatpush.msra.mxu0 0.0
  %122 = vmatpush.msra.mxu0 0.0
  %123 = vmatpush.msra.mxu0 0.0
  %124 = vmatpush.msra.mxu0 0.0
  %125 = vmatpush.msra.mxu0 0.0
  %126 = vmatpush.msra.mxu0 0.0
  %127 = vmatpush.msra.mxu0 0.0
  %128 = vmatpush.msra.mxu0 %v108
  %129 = vmatpush.msra.mxu0 %v107
  %130 = vmatmul.f32.gmra.mxu0 %v112
  %v131 = vpop.f32.mrf.mxu0
  %v132 = vadd.f32 %v109, %v131
  %133 = vdwg.mxu0
  %vm134 = vcmask 25600
  %v135 = vsel %vm134, %v132, -inf
  %v136 = vrot.slane %v135, 4
  %v137 = vmax.f32 %v135, %v136
  %v138 = vrot.slane %v137, 2
  %v139 = vmax.f32 %v137, %v138
  %v140 = vrot.slane %v139, 1
  %v141 = vmax.f32 %v139, %v140
  %v142 = vsub.f32 %v132, %v141
  %v143 = vmul.f32 %v142, 1.442695
  %v144 = vpow.pop %v143
  %v145 = vsel %vm134, %v144, 0.0
  %v146 = vrot.slane %v145, 4
  %v147 = vadd.f32 %v145, %v146
  %v148 = vrot.slane %v147, 2
  %v149 = vadd.f32 %v147, %v148
  %v150 = vrot.slane %v149, 1
  %v151 = vadd.f32 %v149, %v150
  %v152 = vrcp.pop %v151
  %v153 = vmul.f32 %v144, %v152
  %154 = vxpose.xlu0.b32.start [1/16] %v153, 128
  %155 = vxpose.xlu0.b32.cont [2/16] 0.0, 128
  %156 = vxpose.xlu0.b32.cont [3/16] 0.0, 128
  %157 = vxpose.xlu0.b32.cont [4/16] 0.0, 128
  %158 = vxpose.xlu0.b32.cont [5/16] 0.0, 128
  %159 = vxpose.xlu0.b32.cont [6/16] 0.0, 128
  %160 = vxpose.xlu0.b32.cont [7/16] 0.0, 128
  %161 = vxpose.xlu0.b32.cont [8/16] 0.0, 128
  %162 = vxpose.xlu0.b32.cont [9/16] 0.0, 128
  %163 = vxpose.xlu0.b32.cont [10/16] 0.0, 128
  %164 = vxpose.xlu0.b32.cont [11/16] 0.0, 128
  %165 = vxpose.xlu0.b32.cont [12/16] 0.0, 128
  %166 = vxpose.xlu0.b32.cont [13/16] 0.0, 128
  %167 = vxpose.xlu0.b32.cont [14/16] 0.0, 128
  %168 = vxpose.xlu0.b32.cont [15/16] 0.0, 128
  %169 = vxpose.xlu0.b32.end [16/16] 0.0, 128
  %v170 = vpop.trf.xlu0
  %v171 = vpop.trf.xlu0
  %v172 = vpop.trf.xlu0
  %v173 = vpop.trf.xlu0
  %v174 = vpop.trf.xlu0
  %v175 = vpop.trf.xlu0
  %v176 = vpop.trf.xlu0
  %v177 = vpop.trf.xlu0
  %v178 = vpop.trf.xlu0
  %v179 = vpop.trf.xlu0
  %v180 = vpop.trf.xlu0
  %v181 = vpop.trf.xlu0
  %v182 = vpop.trf.xlu0
  %v183 = vpop.trf.xlu0
  %v184 = vpop.trf.xlu0
  %v185 = vpop.trf.xlu0
  %vm186 = vcmask 15360
  %v188 = vsel %vm186, %v170, 0
  %vm190 = vcmask 1041408
  %v191 = vsel %vm190, %v55, 0
  %193 = vmatpush.msra.mxu0 0.0
  %194 = vmatpush.msra.mxu0 0.0
  %195 = vmatpush.msra.mxu0 0.0
  %196 = vmatpush.msra.mxu0 0.0
  %197 = vmatpush.msra.mxu0 0.0
  %198 = vmatpush.msra.mxu0 0.0
  %199 = vmatpush.msra.mxu0 0.0
  %200 = vmatpush.msra.mxu0 0.0
  %201 = vmatpush.msra.mxu0 0.0
  %202 = vmatpush.msra.mxu0 0.0
  %203 = vmatpush.msra.mxu0 0.0
  %204 = vmatpush.msra.mxu0 0.0
  %205 = vmatpush.msra.mxu0 0.0
  %206 = vmatpush.msra.mxu0 0.0
  %207 = vmatpush.msra.mxu0 0.0
  %208 = vmatpush.msra.mxu0 %v191
  %209 = vmatmul.f32.gmra.mxu0 %v188
  %v210 = vpop.f32.mrf.mxu0
  %v211 = vadd.f32 0.0, %v210
  %212 = vdwg.mxu0
  %v213 = vld [vmem:[%s1 + $0x30] sm:$0xf]
  %v214 = vld [vmem:[%s1 + $0x38] sm:$0xf]
  %v216 = vsel %vm56, %v211, 0
  %v219 = vsel %vm26, %v213, 0
  %v222 = vsel %vm26, %v214, 0
  %224 = vmatpush.msra.mxu0 0.0
  %225 = vmatpush.msra.mxu0 0.0
  %226 = vmatpush.msra.mxu0 0.0
  %227 = vmatpush.msra.mxu0 0.0
  %228 = vmatpush.msra.mxu0 0.0
  %229 = vmatpush.msra.mxu0 0.0
  %230 = vmatpush.msra.mxu0 0.0
  %231 = vmatpush.msra.mxu0 0.0
  %232 = vmatpush.msra.mxu0 0.0
  %233 = vmatpush.msra.mxu0 0.0
  %234 = vmatpush.msra.mxu0 0.0
  %235 = vmatpush.msra.mxu0 0.0
  %236 = vmatpush.msra.mxu0 0.0
  %237 = vmatpush.msra.mxu0 0.0
  %238 = vmatpush.msra.mxu0 0.0
  %239 = vmatpush.msra.mxu0 %v219
  %240 = vmatmul.f32.gmra.mxu0 %v216
  %v241 = vpop.f32.mrf.mxu0
  %v242 = vadd.f32 0.0, %v241
  %243 = vdwg.mxu0
  %244 = vmatpush.msra.mxu0 0.0
  %245 = vmatpush.msra.mxu0 0.0
  %246 = vmatpush.msra.mxu0 0.0
  %247 = vmatpush.msra.mxu0 0.0
  %248 = vmatpush.msra.mxu0 0.0
  %249 = vmatpush.msra.mxu0 0.0
  %250 = vmatpush.msra.mxu0 0.0
  %251 = vmatpush.msra.mxu0 0.0
  %252 = vmatpush.msra.mxu0 0.0
  %253 = vmatpush.msra.mxu0 0.0
  %254 = vmatpush.msra.mxu0 0.0
  %255 = vmatpush.msra.mxu0 0.0
  %256 = vmatpush.msra.mxu0 0.0
  %257 = vmatpush.msra.mxu0 0.0
  %258 = vmatpush.msra.mxu0 0.0
  %259 = vmatpush.msra.mxu0 %v222
  %260 = vmatmul.f32.gmra.mxu0 %v216
  %v261 = vpop.f32.mrf.mxu0
  %v262 = vadd.f32 0.0, %v261
  %263 = vdwg.mxu0
  %v264 = vld [vmem:[%s1 + $0x6] ss:$0 sm:$0xff]
  %v265 = vadd.f32 %v264, %v242
  %v267 = vrot.slane %v242, 1
  %268 = vrot.lane.b32.xlu0 %v267, 64
  %v269 = vpop.permute.xlu0 %268
  %v271 = vadd.f32 %v265, %v269
  %v273 = vrot.slane %v262, 2
  %v275 = vadd.f32 %v271, %v273
  %v276 = vrot.slane %v262, 3
  %277 = vrot.lane.b32.xlu0 %v276, 64
  %v278 = vpop.permute.xlu0 %277
  %v280 = vadd.f32 %v275, %v278
  %v281 = vmax.f32 %v280, 0.0
  %v282 = vld [vmem:[%s1 + $0x30] sm:$0x30]
  %v283 = vld [vmem:[%s1 + $0x7] ss:$0 sm:$0xff]
  %v285 = vrot.slane %v282, 4
  %vm286 = vcmask 523264
  %v288 = vsel %vm286, %v281, 0
  %v290 = vsel %vm286, %v285, 0
  %292 = vmatpush.xpose.msra.mxu0 0.0
  %293 = vmatpush.xpose.msra.mxu0 0.0
  %294 = vmatpush.xpose.msra.mxu0 0.0
  %295 = vmatpush.xpose.msra.mxu0 0.0
  %296 = vmatpush.xpose.msra.mxu0 0.0
  %297 = vmatpush.xpose.msra.mxu0 0.0
  %298 = vmatpush.xpose.msra.mxu0 0.0
  %299 = vmatpush.xpose.msra.mxu0 0.0
  %300 = vmatpush.xpose.msra.mxu0 0.0
  %301 = vmatpush.xpose.msra.mxu0 0.0
  %302 = vmatpush.xpose.msra.mxu0 0.0
  %303 = vmatpush.xpose.msra.mxu0 0.0
  %304 = vmatpush.xpose.msra.mxu0 0.0
  %305 = vmatpush.xpose.msra.mxu0 0.0
  %306 = vmatpush.xpose.msra.mxu0 0.0
  %307 = vmatpush.xpose.msra.mxu0 %v290
  %308 = vmatmul.f32.gmra.mxu0 %v288
  %v309 = vpop.f32.mrf.mxu0
  %v310 = vadd.f32 %v283, %v309
  %311 = vdwg.mxu0
  %313 = vrot.lane.b32.xlu0 %v153, 2
  %v314 = vpop.permute.xlu0 %313
  %v316 = vrot.slane %v153, 1
  %317 = vrot.lane.b32.xlu0 %v316, 6
  %v318 = vpop.permute.xlu0 %317
  %v320 = vsel %vm186, %v310, %v314
  %vm321 = vcmask 48128
  %v322 = vsel %vm321, %v320, %v318
  %vm323 = vcmask 80896
  %v324 = vsel %vm323, %v322, 0.0
  %325 = vst [vmem:[%s2] sm:$0x1] %v324
  // Predicated region
  $region10: #{attention_model_forward.1} parent=0 // pred_check
    _
  $region11: #{attention_model_forward.1} parent=0 // pred_check_branch
    %327 = sbr.rel (0) target = $region13
  $region12: #{attention_model_forward.1} parent=0 // pred_region
    _
  $region13: #{attention_model_forward.1} parent=0 // pred_fallthru
    _
  // Predicated region
  $region14: #{attention_model_forward.1} parent=0 // pred_check
    _
  $region15: #{attention_model_forward.1} parent=0 // pred_check_branch
    %329 = sbr.rel (0) target = $region17
  $region16: #{attention_model_forward.1} parent=0 // pred_region
    _
  $region17: #{attention_model_forward.1} parent=0 // pred_fallthru
    _

</llo_original>
